<compile_context>
chip_gen: v7x
topology: tpu7x:2x2x1
jax: 0.10.0
libtpu: 0.0.40
codegen_flags: <defaults>
</compile_context>

<pallas_src>
import functools

import jax
import jax.numpy as jnp
from jax.experimental import pallas as pl
from jax.experimental.pallas import tpu as pltpu

# FocalLoss hyper-parameters are fixed inside CombinedLoss: FocalLoss(alpha=1, gamma=2)
_FOCAL_ALPHA = 1.0
_FOCAL_GAMMA = 2.0  # gamma == 2 -> implemented as a square (no pow)

_NEG_INF = float("-inf")


def _combined_loss_kernel(x_ref, t_ref, ce_ref,
                          m_sc, l_sc, p_sc,
                          *, c, tile_n, tile_c, mask_cols):
    """grid = (num_row_tiles, num_class_tiles); class axis is the inner loop.

    Streams (tile_n, tile_c) logit blocks, keeps an online log-sum-exp and the
    gathered target logit per row in VMEM scratch, and writes per-example CE
    (lse - picked) to ce_ref on the last class tile of each row tile.
    """
    j = pl.program_id(1)        # class-tile index (reduction axis)
    nj = pl.num_programs(1)

    # ---------------- per-row-tile init ----------------
    @pl.when(j == 0)
    def _init_row_tile():
        m_sc[...] = jnp.full((tile_n, 1), _NEG_INF, jnp.float32)
        l_sc[...] = jnp.zeros((tile_n, 1), jnp.float32)
        p_sc[...] = jnp.zeros((tile_n, 1), jnp.float32)

    # ---------------- streamed (tile_n, tile_c) block ----------------
    x = x_ref[...].astype(jnp.float32)   # bf16 inputs stay bf16 in HBM; upcast in VMEM
    t = t_ref[...]                       # (tile_n, 1) int32 target class ids

    # Static local iota (0..tile_c-1); shift the *small* side (targets / scalar
    # limit) by j*tile_c instead of adding j*tile_c to the full tile.
    col = jax.lax.broadcasted_iota(jnp.int32, (tile_n, tile_c), 1)
    t_local = t - j * tile_c             # (tile_n, 1)

    if mask_cols:
        # Only emitted when C % tile_c != 0: mask padded class columns for the LSE.
        limit = c - j * tile_c           # scalar threshold
        x_m = jnp.where(col < limit, x, _NEG_INF)
    else:
        x_m = x

    # Online log-sum-exp update (max/sum -> XLU, exp -> EUP).
    m_prev = m_sc[...]
    m_new = jnp.maximum(m_prev, jnp.max(x_m, axis=-1, keepdims=True))
    scale = jnp.exp(m_prev - m_new)
    l_sc[...] = scale * l_sc[...] + jnp.sum(jnp.exp(x_m - m_new), axis=-1, keepdims=True)
    m_sc[...] = m_new

    # Fused one-hot gather of the target logit (select + reduce; no (N, C) one-hot).
    # Padded columns can never match a valid target id, so no extra mask is needed.
    p_sc[...] += jnp.sum(jnp.where(col == t_local, x, 0.0), axis=-1, keepdims=True)

    # ---------------- per-row-tile finalize: per-example CE ----------------
    @pl.when(j == nj - 1)
    def _row_finalize():
        ce_ref[...] = m_sc[...] + jnp.log(l_sc[...]) - p_sc[...]


def _pick_tile(dim, max_tile, align):
    """Largest legal tile <= max_tile, preferring one that evenly divides dim
    (so the trace-time pad-mask elision kicks in), as long as it is not much
    smaller than max_tile."""
    if dim <= max_tile:
        return dim                       # full-extent block is always legal
    largest = max(align, (max_tile // align) * align)
    lo = max(align, largest // 2)
    for cand in range(largest, lo - 1, -align):
        if dim % cand == 0:
            return cand
    return largest


def combined_loss(logits, targets, *, alpha=1.0, beta=1.0, gamma=1.0,
                  tile_n=1024, tile_c=2048, cast_to_bf16=False,
                  vmem_limit_bytes=48 * 1024 * 1024):
    """CombinedLoss(alpha, beta, gamma).forward(logits, targets) — Pallas TPU kernel.

    logits:  (N, C) float32 or bfloat16 predicted logits.
    targets: (N,)   integer class ids.
    Returns a scalar float32 loss.
    """
    if cast_to_bf16 and logits.dtype == jnp.float32:
        # Opt-in: halves HBM traffic on mem-bound v5e/v6e (slightly different numerics).
        logits = logits.astype(jnp.bfloat16)

    n, c = logits.shape

    # Row-tile alignment follows the packed-sublane granule of the input dtype.
    itemsize = jnp.dtype(logits.dtype).itemsize
    row_align = {4: 8, 2: 16, 1: 32}.get(itemsize, 8)

    tn = _pick_tile(n, tile_n, row_align)
    tc = _pick_tile(c, tile_c, 128)
    grid = (pl.cdiv(n, tn), pl.cdiv(c, tc))
    t2d = targets.astype(jnp.int32).reshape(n, 1)

    kernel = functools.partial(
        _combined_loss_kernel, c=c, tile_n=tn, tile_c=tc,
        mask_cols=(c % tc != 0))

    ce_rows = pl.pallas_call(
        kernel,
        out_shape=jax.ShapeDtypeStruct((n, 1), jnp.float32),
        grid=grid,
        in_specs=[
            pl.BlockSpec((tn, tc), lambda i, j: (i, j)),   # streamed logit tiles
            pl.BlockSpec((tn, 1), lambda i, j: (i, 0)),    # targets, resident per row tile
        ],
        out_specs=pl.BlockSpec((tn, 1), lambda i, j: (i, 0)),  # per-example CE
        scratch_shapes=[
            pltpu.VMEM((tn, 1), jnp.float32),   # running row max       (m)
            pltpu.VMEM((tn, 1), jnp.float32),   # running sum of exp    (l)
            pltpu.VMEM((tn, 1), jnp.float32),   # gathered target logit (picked)
        ],
        compiler_params=pltpu.CompilerParams(
            # Row tiles are fully independent -> megacore shards them on v7x.
            dimension_semantics=("parallel", "arbitrary"),
            vmem_limit_bytes=vmem_limit_bytes,
        ),
    )(logits, t2d)

    # Tiny scalar epilogue in plain JAX (exactly the PyTorch module's combine):
    ce = jnp.mean(ce_rows[:, 0])                       # CrossEntropyLoss (mean)
    pt = jnp.exp(-ce)
    one_minus_pt = 1.0 - pt
    focal = _FOCAL_ALPHA * one_minus_pt * one_minus_pt * ce   # FocalLoss(1, 2) on mean CE
    # KLDivLoss(batchmean) vs. a hard one-hot target reduces exactly to mean CE
    # (target * log(target) terms are zero; the one-hot picks -log_softmax).
    kld = ce
    return alpha * ce + beta * focal + gamma * kld


def combined_loss_ref(logits, targets, *, alpha, beta, gamma):
    """Plain-JAX reference with the same semantics as the PyTorch CombinedLoss."""
    x = logits.astype(jnp.float32)
    n, c = x.shape
    lse = jax.scipy.special.logsumexp(x, axis=-1)
    picked = x[jnp.arange(n), targets]
    ce = jnp.mean(lse - picked)
    pt = jnp.exp(-ce)
    focal = _FOCAL_ALPHA * (1.0 - pt) ** _FOCAL_GAMMA * ce
    logp = jax.nn.log_softmax(x, axis=-1)
    onehot = jax.nn.one_hot(targets, c, dtype=jnp.float32)
    kld = jnp.sum(jnp.where(onehot > 0, onehot * (0.0 - logp), 0.0)) / n  # log(1) == 0
    return alpha * ce + beta * focal + gamma * kld


if __name__ == "__main__":
    key = jax.random.PRNGKey(0)
    A, B, G = 0.5, 0.3, 0.2   # CombinedLoss(alpha, beta, gamma) weights

    tests = [
        # (N,   C,   dtype,        tile_n, tile_c)
        (8,    32,  jnp.float32,  1024,   2048),   # single full-extent block (small demo shape)
        (256,  384, jnp.float32,  128,    128),    # 2x3 grid, evenly-dividing tiles (mask elided)
        (100,  200, jnp.bfloat16, 64,     128),    # ragged tiles (row+col padding) + bf16 input
    ]
    for idx, (n, c, dtype, tn, tc) in enumerate(tests):
        k1, k2, key = jax.random.split(key, 3)
        logits = jax.random.normal(k1, (n, c), dtype=jnp.float32).astype(dtype)
        targets = jax.random.randint(k2, (n,), 0, c, dtype=jnp.int32)

        got = combined_loss(logits, targets, alpha=A, beta=B, gamma=G,
                            tile_n=tn, tile_c=tc)
        jax.block_until_ready(got)
        want = combined_loss_ref(logits, targets, alpha=A, beta=B, gamma=G)
        assert jnp.allclose(got, want, atol=1e-4, rtol=1e-4), (idx, got, want)

    print("KERNEL_OK")
</pallas_src>

<mosaic_0001>
module attributes {stable_mosaic.version = 11 : i64} {
  func.func @_combined_loss_kernel(%arg0: i32, %arg1: i32, %arg2: memref<8x32xf32, #tpu.memory_space<vmem>>, %arg3: memref<8x1xi32, #tpu.memory_space<vmem>>, %arg4: memref<8x1xf32, #tpu.memory_space<vmem>>, %arg5: memref<8x1xf32, #tpu.memory_space<vmem>>, %arg6: memref<8x1xf32, #tpu.memory_space<vmem>>, %arg7: memref<8x1xf32, #tpu.memory_space<vmem>>) attributes {dimension_semantics = [#tpu.dimension_semantics<parallel>, #tpu.dimension_semantics<arbitrary>], iteration_bounds = array<i64: 1, 1>, scalar_prefetch = 0 : i64, scratch_operands = 3 : i64, tpu.core_type = #tpu.core_type<tc>, window_params = [{transform_indices = @transform_0, window_bounds = array<i64: 8, 32>}, {transform_indices = @transform_1, window_bounds = array<i64: 8, 1>}, {transform_indices = @transform_2, window_bounds = array<i64: 8, 1>}]} {
    %c0_i32 = arith.constant 0 : i32
    %0 = arith.cmpi eq, %arg1, %c0_i32 : i32
    %1 = arith.extui %0 : i1 to i32
    %c0_i32_0 = arith.constant 0 : i32
    %2 = arith.cmpi ne, %1, %c0_i32_0 : i32
    scf.if %2 {
      %cst_21 = arith.constant 0xFF800000 : f32
      %37 = vector.broadcast %cst_21 : f32 to vector<8x1xf32>
      %c0_22 = arith.constant 0 : index
      %c0_23 = arith.constant 0 : index
      %38 = vector.load %arg5[%c0_22, %c0_23] : memref<8x1xf32, #tpu.memory_space<vmem>>, vector<8x1xf32>
      tpu.vector_store %arg5[%c0_22, %c0_23], %37 {strides = array<i32>} : memref<8x1xf32, #tpu.memory_space<vmem>>, vector<8x1xf32>,
      %cst_24 = arith.constant 0.000000e+00 : f32
      %39 = vector.broadcast %cst_24 : f32 to vector<8x1xf32>
      %c0_25 = arith.constant 0 : index
      %c0_26 = arith.constant 0 : index
      %40 = vector.load %arg6[%c0_25, %c0_26] : memref<8x1xf32, #tpu.memory_space<vmem>>, vector<8x1xf32>
      tpu.vector_store %arg6[%c0_25, %c0_26], %39 {strides = array<i32>} : memref<8x1xf32, #tpu.memory_space<vmem>>, vector<8x1xf32>,
      %cst_27 = arith.constant 0.000000e+00 : f32
      %41 = vector.broadcast %cst_27 : f32 to vector<8x1xf32>
      %c0_28 = arith.constant 0 : index
      %c0_29 = arith.constant 0 : index
      %42 = vector.load %arg7[%c0_28, %c0_29] : memref<8x1xf32, #tpu.memory_space<vmem>>, vector<8x1xf32>
      tpu.vector_store %arg7[%c0_28, %c0_29], %41 {strides = array<i32>} : memref<8x1xf32, #tpu.memory_space<vmem>>, vector<8x1xf32>,
    } else {
    }
    %c0 = arith.constant 0 : index
    %c0_1 = arith.constant 0 : index
    %3 = vector.load %arg2[%c0, %c0_1] : memref<8x32xf32, #tpu.memory_space<vmem>>, vector<8x32xf32>
    %c0_2 = arith.constant 0 : index
    %c0_3 = arith.constant 0 : index
    %4 = vector.load %arg3[%c0_2, %c0_3] : memref<8x1xi32, #tpu.memory_space<vmem>>, vector<8x1xi32>
    %5 = tpu.iota {dimensions = array<i32: 1>} : vector<8x32xi32>
    %c32_i32 = arith.constant 32 : i32
    %6 = arith.muli %arg1, %c32_i32 : i32
    %7 = vector.broadcast %6 : i32 to vector<8x1xi32>
    %8 = arith.subi %4, %7 : vector<8x1xi32>
    %c0_4 = arith.constant 0 : index
    %c0_5 = arith.constant 0 : index
    %9 = vector.load %arg5[%c0_4, %c0_5] : memref<8x1xf32, #tpu.memory_space<vmem>>, vector<8x1xf32>
    %cst = arith.constant dense<0xFF800000> : vector<8xf32>
    %10 = vector.multi_reduction <maximumf>, %3, %cst [1] : vector<8x32xf32> to vector<8xf32>
    %11 = vector.shape_cast %10 : vector<8xf32> to vector<8x1xf32>
    %12 = arith.maximumf %9, %11 : vector<8x1xf32>
    %13 = arith.subf %9, %12 : vector<8x1xf32>
    %14 = math.exp %13 : vector<8x1xf32>
    %c0_6 = arith.constant 0 : index
    %c0_7 = arith.constant 0 : index
    %15 = vector.load %arg6[%c0_6, %c0_7] : memref<8x1xf32, #tpu.memory_space<vmem>>, vector<8x1xf32>
    %16 = arith.mulf %14, %15 : vector<8x1xf32>
    %17 = vector.broadcast %12 : vector<8x1xf32> to vector<8x32xf32>
    %18 = arith.subf %3, %17 : vector<8x32xf32>
    %19 = math.exp %18 : vector<8x32xf32>
    %cst_8 = arith.constant dense<0.000000e+00> : vector<8xf32>
    %20 = vector.multi_reduction <add>, %19, %cst_8 [1] : vector<8x32xf32> to vector<8xf32>
    %21 = vector.shape_cast %20 : vector<8xf32> to vector<8x1xf32>
    %22 = arith.addf %16, %21 : vector<8x1xf32>
    %c0_9 = arith.constant 0 : index
    %c0_10 = arith.constant 0 : index
    %23 = vector.load %arg6[%c0_9, %c0_10] : memref<8x1xf32, #tpu.memory_space<vmem>>, vector<8x1xf32>
    tpu.vector_store %arg6[%c0_9, %c0_10], %22 {strides = array<i32>} : memref<8x1xf32, #tpu.memory_space<vmem>>, vector<8x1xf32>,
    %c0_11 = arith.constant 0 : index
    %c0_12 = arith.constant 0 : index
    %24 = vector.load %arg5[%c0_11, %c0_12] : memref<8x1xf32, #tpu.memory_space<vmem>>, vector<8x1xf32>
    tpu.vector_store %arg5[%c0_11, %c0_12], %12 {strides = array<i32>} : memref<8x1xf32, #tpu.memory_space<vmem>>, vector<8x1xf32>,
    %c0_13 = arith.constant 0 : index
    %c0_14 = arith.constant 0 : index
    %25 = vector.load %arg7[%c0_13, %c0_14] : memref<8x1xf32, #tpu.memory_space<vmem>>, vector<8x1xf32>
    %26 = vector.broadcast %8 : vector<8x1xi32> to vector<8x32xi32>
    %27 = arith.cmpi eq, %5, %26 : vector<8x32xi32>
    %cst_15 = arith.constant 0.000000e+00 : f32
    %28 = vector.broadcast %cst_15 : f32 to vector<8x32xf32>
    %29 = arith.select %27, %3, %28 : vector<8x32xi1>, vector<8x32xf32>
    %cst_16 = arith.constant dense<0.000000e+00> : vector<8xf32>
    %30 = vector.multi_reduction <add>, %29, %cst_16 [1] : vector<8x32xf32> to vector<8xf32>
    %31 = vector.shape_cast %30 : vector<8xf32> to vector<8x1xf32>
    %32 = arith.addf %25, %31 : vector<8x1xf32>
    %c0_17 = arith.constant 0 : index
    %c0_18 = arith.constant 0 : index
    %33 = vector.load %arg7[%c0_17, %c0_18] : memref<8x1xf32, #tpu.memory_space<vmem>>, vector<8x1xf32>
    tpu.vector_store %arg7[%c0_17, %c0_18], %32 {strides = array<i32>} : memref<8x1xf32, #tpu.memory_space<vmem>>, vector<8x1xf32>,
    %c0_i32_19 = arith.constant 0 : i32
    %34 = arith.cmpi eq, %arg1, %c0_i32_19 : i32
    %35 = arith.extui %34 : i1 to i32
    %c0_i32_20 = arith.constant 0 : i32
    %36 = arith.cmpi ne, %35, %c0_i32_20 : i32
    scf.if %36 {
      %c0_21 = arith.constant 0 : index
      %c0_22 = arith.constant 0 : index
      %37 = vector.load %arg5[%c0_21, %c0_22] : memref<8x1xf32, #tpu.memory_space<vmem>>, vector<8x1xf32>
      %c0_23 = arith.constant 0 : index
      %c0_24 = arith.constant 0 : index
      %38 = vector.load %arg6[%c0_23, %c0_24] : memref<8x1xf32, #tpu.memory_space<vmem>>, vector<8x1xf32>
      %39 = math.log %38 : vector<8x1xf32>
      %40 = arith.addf %37, %39 : vector<8x1xf32>
      %c0_25 = arith.constant 0 : index
      %c0_26 = arith.constant 0 : index
      %41 = vector.load %arg7[%c0_25, %c0_26] : memref<8x1xf32, #tpu.memory_space<vmem>>, vector<8x1xf32>
      %42 = arith.subf %40, %41 : vector<8x1xf32>
      %c0_27 = arith.constant 0 : index
      %c0_28 = arith.constant 0 : index
      %43 = vector.load %arg4[%c0_27, %c0_28] : memref<8x1xf32, #tpu.memory_space<vmem>>, vector<8x1xf32>
      tpu.vector_store %arg4[%c0_27, %c0_28], %42 {strides = array<i32>} : memref<8x1xf32, #tpu.memory_space<vmem>>, vector<8x1xf32>,
    } else {
    }
    return
  }
  func.func @transform_0(%arg0: i32, %arg1: i32) -> (i32, i32) {
    %c0_i32 = arith.constant 0 : i32
    return %arg0, %arg1 : i32, i32
  }
  func.func @transform_1(%arg0: i32, %arg1: i32) -> (i32, i32) {
    %c0_i32 = arith.constant 0 : i32
    %c0_i32_0 = arith.constant 0 : i32
    return %arg0, %c0_i32 : i32, i32
  }
  func.func @transform_2(%arg0: i32, %arg1: i32) -> (i32, i32) {
    %c0_i32 = arith.constant 0 : i32
    %c0_i32_0 = arith.constant 0 : i32
    return %arg0, %c0_i32 : i32, i32
  }
}

</mosaic_0001>

<llo_original>
// kernel: tpu_custom_call.1
$region0: #{tpu_custom_call.1}
  #allocation0 [shape = 'u32[]', space=smem, size = 0x4, offset = 0x4, fixed_abs, tag = 'smem constant byte address 0x4 - core index']
  #allocation1 [shape = 'u32[144,128]{1,0:T(1,128)}', space=vmem, size = 0x12000, scoped, tag = 'internal scratch']
  #allocation2 [shape = 'f32[8,1]{1,0:T(8,128)}', space=vmem, size = 0x1000, scoped, tag = 'scratch operand']
  #allocation3 [shape = 'f32[8,1]{1,0:T(8,128)}', space=vmem, size = 0x1000, scoped, tag = 'scratch operand']
  #allocation4 [shape = 'f32[8,1]{1,0:T(8,128)}', space=vmem, size = 0x1000, scoped, tag = 'scratch operand']
  %s0 = inlined_call_operand.vmem [shape: f32[8,32], index: 0, kind: input, shape index: {}]
  %s1 = inlined_call_operand.vmem [shape: s32[8,1], index: 1, kind: input, shape index: {}]
  %s2 = inlined_call_operand.vmem [shape: f32[8,1], index: 2, kind: output, shape index: {}]
  %s3 = sld [smem:[#allocation0]]
  $region26: #{tpu_custom_call.1} parent=0
    _
  %s5 = ssub.s32 1, %s3
  %s6 = scalar_select 0, %s5, %s3
  // Predicated region
  $region2: #{tpu_custom_call.1} parent=0 // pred_check
    _
  $region3: #{tpu_custom_call.1} parent=0 // pred_check_branch
    %8 = sbr.rel (0) target = $region5
  $region4: #{tpu_custom_call.1} parent=0 // pred_region
    _
  $region5: #{tpu_custom_call.1} parent=0 // pred_fallthru
    _
  // Predicated region
  $region6: #{tpu_custom_call.1} parent=0 // pred_check
    _
  $region7: #{tpu_custom_call.1} parent=0 // pred_check_branch
    %10 = sbr.rel (0) target = $region9
  $region8: #{tpu_custom_call.1} parent=0 // pred_region
    _
  $region9: #{tpu_custom_call.1} parent=0 // pred_fallthru
    _
  %p11 = scmp.eq.s32.totalorder 0, 0
  // Predicated region
  $region10: #{tpu_custom_call.1} parent=0 // pred_check
    %p12 = pneg %p11
  $region11: #{tpu_custom_call.1} parent=0 // pred_check_branch
    %14 = sbr.rel (%p12) target = $region13
  $region12: #{tpu_custom_call.1} parent=0 // pred_region
    %vm15 = vcmask 7168
    %16 = vst.msk [vmem:[#allocation2] sm:$0xff] %vm15, -inf
    %17 = vst.msk [vmem:[#allocation3] sm:$0xff] %vm15, 0.0
    %18 = vst.msk [vmem:[#allocation4] sm:$0xff] %vm15, 0.0
  $region13: #{tpu_custom_call.1} parent=0 // pred_fallthru
    _
  %v19 = vld [vmem:[%s0] sm:$0xff]
  %v20 = vld [vmem:[%s1] sm:$0xff]
  %v21 = vlaneseq
  %v22 = vand.u32 %v21, 127
  %s23 = smul.u32 0, 32
  %v24 = vstv %s23
  %v25 = vsub.s32 %v20, %v24
  %v26 = vld [vmem:[#allocation2] sm:$0xff]
  %vm27 = vcmask 261120
  %v28 = vsel %vm27, %v19, -inf
  %29 = vmax.xlane.f32.xlu0 %v28
  %v30 = vpop.xlane.xlu0 %29
  %v31 = vmax.f32 %v26, %v30
  %v32 = vsub.f32 %v26, %v31
  %v33 = vmul.f32 %v32, 1.442695
  %v34 = vpow.pop %v33
  %v35 = vld [vmem:[#allocation3] sm:$0xff]
  %v36 = vmul.f32 %v34, %v35
  %38 = vset.pattern.permute.xlu0 0
  %39 = vperm.xlu0 %38, %v31
  %v40 = vpop.permute.xlu0 %39
  %v42 = vsub.f32 %v19, %v40
  %v43 = vmul.f32 %v42, 1.442695
  %v44 = vpow.pop %v43
  %v45 = vsel %vm27, %v44, 0.0
  %46 = vadd.xlane.f32.xlu0 %v45
  %v47 = vpop.xlane.xlu0 %46
  %v48 = vadd.f32 %v36, %v47
  %vm49 = vcmask 7168
  %50 = vst.msk [vmem:[#allocation3] sm:$0xff] %vm49, %v48
  %51 = vst.msk [vmem:[#allocation2] sm:$0xff] %vm49, %v31
  %v52 = vld [vmem:[#allocation4] sm:$0xff]
  %53 = vset.pattern.permute.xlu0 0
  %54 = vperm.xlu0 %53, %v25
  %v55 = vpop.permute.xlu0 %54
  %vm56 = vcmp.eq.s32.totalorder %v22, %v55
  %v57 = vsel %vm56, %v19, 0.0
  %v58 = vsel %vm27, %v57, 0.0
  %59 = vadd.xlane.f32.xlu0 %v58
  %v60 = vpop.xlane.xlu0 %59
  %v61 = vadd.f32 %v52, %v60
  %62 = vst.msk [vmem:[#allocation4] sm:$0xff] %vm49, %v61
  // Predicated region
  $region14: #{tpu_custom_call.1} parent=0 // pred_check
    %p63 = pneg %p11
  $region15: #{tpu_custom_call.1} parent=0 // pred_check_branch
    %65 = sbr.rel (%p63) target = $region17
  $region16: #{tpu_custom_call.1} parent=0 // pred_region
    %v66 = vld [vmem:[#allocation2] sm:$0xff]
    %v67 = vld [vmem:[#allocation3] sm:$0xff]
    %v68 = vlog2.pop %v67
    %v69 = vmul.f32 %v68, 0.6931472
    %v70 = vadd.f32 %v66, %v69
    %v71 = vld [vmem:[#allocation4] sm:$0xff]
    %v72 = vsub.f32 %v70, %v71
    %73 = vst.msk [vmem:[%s2] sm:$0xff] %vm49, %v72
  $region17: #{tpu_custom_call.1} parent=0 // pred_fallthru
    _
  // Predicated region
  $region18: #{tpu_custom_call.1} parent=0 // pred_check
    _
  $region19: #{tpu_custom_call.1} parent=0 // pred_check_branch
    %75 = sbr.rel (0) target = $region21
  $region20: #{tpu_custom_call.1} parent=0 // pred_region
    _
  $region21: #{tpu_custom_call.1} parent=0 // pred_fallthru
    _
  // Predicated region
  $region22: #{tpu_custom_call.1} parent=0 // pred_check
    _
  $region23: #{tpu_custom_call.1} parent=0 // pred_check_branch
    %77 = sbr.rel (0) target = $region25
  $region24: #{tpu_custom_call.1} parent=0 // pred_region
    _
  $region25: #{tpu_custom_call.1} parent=0 // pred_fallthru
    _

</llo_original>
